<compile_context>
chip_gen: v7x
topology: tpu7x:2x2x1
jax: 0.10.0
libtpu: 0.0.40
codegen_flags: <defaults>
</compile_context>

<pallas_src>
import functools

import jax
import jax.numpy as jnp
from jax.experimental import pallas as pl
from jax.experimental.pallas import tpu as pltpu


# ----------------------------------------------------------------------------
# Fused Pallas kernel: gc1 + Switch_Norm_1D + LeakyReLU + gc2 + LeakyReLU
# ----------------------------------------------------------------------------
def _fused_chebnet_kernel(x_ref, l_ref, w1_ref, w2_ref, pack_ref, stat_ref,
                          sw_ref, o_ref, *, K, B, H, eps):
    f32 = jnp.float32
    bf16 = jnp.bfloat16

    L = l_ref[...]                              # (S, S) bf16 (dot operand only)

    def cheb_graph_conv(t0, w_ref):
        # t0: (S, B*f) fp32.  w_ref[k]: (B*f, B*H) bf16 = kron(I_B, W_k).
        # Per-order accumulation (no scratch slab); recurrence state fp32,
        # dot operands bf16, fp32 accumulation on the MXU.
        acc = jnp.dot(t0.astype(bf16), w_ref[0], preferred_element_type=f32)
        if K >= 2:
            t_prev2 = t0
            t_prev1 = jnp.dot(L, t0.astype(bf16), preferred_element_type=f32)
            acc = acc + jnp.dot(t_prev1.astype(bf16), w_ref[1],
                                preferred_element_type=f32)
            for k in range(2, K):
                t_cur = 2.0 * jnp.dot(L, t_prev1.astype(bf16),
                                      preferred_element_type=f32) - t_prev2
                acc = acc + jnp.dot(t_cur.astype(bf16), w_ref[k],
                                    preferred_element_type=f32)
                t_prev2, t_prev1 = t_prev1, t_cur
        return acc                               # (S, B*H) fp32

    b1 = pack_ref[0:1, :]                        # (1, B*H)  (bias, tiled over B)
    b2 = pack_ref[1:2, :]
    gamma = pack_ref[2:3, :]
    beta = pack_ref[3:4, :]

    # ---- gc1 ----
    h1 = cheb_graph_conv(x_ref[...], w1_ref) + b1            # (S, B*H) fp32

    # ---- Switch_Norm_1D (softmax-mixed LN / BN statistics) ----
    # TODO(synk): Switch_Norm_1D source not provided; implemented as the
    # standard switchable norm (softmax-weighted LN/BN stats, biased variance,
    # no eval-mode running statistics).
    mw0, mw1 = sw_ref[0], sw_ref[1]
    vw0, vw1 = sw_ref[2], sw_ref[3]
    p_ln = stat_ref[0]    # (B*H, B*H): block-diag ones/H  -> per-(s,b) LN mean
    q_bn = stat_ref[1]    # (B*H, B*H): kron(1_BxB, I_H)/(B*S) -> BN batch fold

    mean_ln = jnp.dot(h1, p_ln, preferred_element_type=f32)           # (S, BH)
    var_ln = jnp.dot((h1 - mean_ln) ** 2, p_ln, preferred_element_type=f32)
    mean_bn = jnp.dot(jnp.sum(h1, axis=0, keepdims=True), q_bn,
                      preferred_element_type=f32)                     # (1, BH)
    var_bn = jnp.dot(jnp.sum((h1 - mean_bn) ** 2, axis=0, keepdims=True), q_bn,
                     preferred_element_type=f32)                      # (1, BH)

    mean = mw0 * mean_ln + mw1 * mean_bn
    var = vw0 * var_ln + vw1 * var_bn
    y = (h1 - mean) * jax.lax.rsqrt(var + eps) * gamma + beta
    y = jnp.where(y >= 0.0, y, 0.01 * y)                              # LeakyReLU

    # ---- gc2 + LeakyReLU ----
    h2 = cheb_graph_conv(y, w2_ref) + b2                              # (S, B*H)
    o_ref[...] = jnp.where(h2 >= 0.0, h2, 0.01 * h2).astype(o_ref.dtype)


# ----------------------------------------------------------------------------
# One-time prep (hoisted out of the per-forward path) + forward wrapper
# ----------------------------------------------------------------------------
def graph_to_laplacian(graph):
    d = jnp.sum(graph, axis=1) ** (-0.5)
    D = jnp.diag(d)
    return jnp.eye(graph.shape[0], dtype=graph.dtype) - D @ graph @ D


def prepare_merge_chebnet(params, graph, batch_size, *, K):
    """One-time graph / parameter preprocessing (do NOT redo per forward)."""
    B = batch_size
    graph = graph if graph.ndim == 2 else graph.squeeze(0)
    L = graph_to_laplacian(graph.astype(jnp.float32))
    S = L.shape[0]
    H = params["w1"].shape[-1]

    eye_b = jnp.eye(B, dtype=jnp.float32)
    # Per-order weights folded with batch via kron(I_B, W_k); the zeros live
    # inside the MXU's contraction-dim padding so they cost nothing here
    # (unlike kron on L, whose footprint/FLOPs would scale as (B*S)^2).
    w1k = jnp.stack([jnp.kron(eye_b, params["w1"][:, k, :]) for k in range(K)])
    w2k = jnp.stack([jnp.kron(eye_b, params["w2"][:, k, :]) for k in range(K)])

    # Packed small parameters: rows = [b1, b2, gamma, beta], each tiled over B
    # so they broadcast directly over the (S, B*H) lane layout.
    pack = jnp.concatenate([
        jnp.tile(params["b1"].astype(jnp.float32), (1, B)),
        jnp.tile(params["b2"].astype(jnp.float32), (1, B)),
        jnp.tile(params["sn_gamma"].astype(jnp.float32), (1, B)),
        jnp.tile(params["sn_beta"].astype(jnp.float32), (1, B)),
    ], axis=0)                                                    # (4, B*H)

    # Switch-norm statistic matrices (lane-dense MXU formulation of the
    # per-(s,b) layer-norm mean and the over-(s,b) batch-norm fold).
    p_ln = jnp.kron(eye_b, jnp.ones((H, H), jnp.float32)) / float(H)
    q_bn = jnp.kron(jnp.ones((B, B), jnp.float32),
                    jnp.eye(H, dtype=jnp.float32)) / float(B * S)
    stat_mats = jnp.stack([p_ln, q_bn])                           # (2, BH, BH)

    sw = jnp.concatenate([jax.nn.softmax(params["sn_mean_w"]),
                          jax.nn.softmax(params["sn_var_w"])]).astype(jnp.float32)

    return {"L": L.astype(jnp.bfloat16),
            "w1k": w1k.astype(jnp.bfloat16),
            "w2k": w2k.astype(jnp.bfloat16),
            "pack": pack, "stat_mats": stat_mats, "sw": sw}


def merge_chebnet_forward(inputs, prep, *, K, eps=1e-5):
    """inputs: (B, S, ...) -> (B, S, 1, hid) via one fused Pallas kernel."""
    B, S = inputs.shape[0], inputs.shape[1]
    x = inputs.reshape(B, S, -1).astype(jnp.float32)      # torch .view(B,S,-1)
    C = x.shape[-1]
    BH = prep["pack"].shape[-1]
    H = BH // B

    # Fold batch into the lane dimension: rows = stations, columns = (b, c)
    # pairs, so every Chebyshev step is one (S,S)@(S,B*C) MXU matmul.
    x_bl = jnp.transpose(x, (1, 0, 2)).reshape(S, B * C)

    kernel = functools.partial(_fused_chebnet_kernel, K=K, B=B, H=H, eps=eps)
    vmem = pl.BlockSpec(memory_space=pltpu.MemorySpace.VMEM)
    smem = pl.BlockSpec(memory_space=pltpu.MemorySpace.SMEM)
    out = pl.pallas_call(
        kernel,
        out_shape=jax.ShapeDtypeStruct((S, B * H), jnp.float32),
        in_specs=[vmem,    # x_bl       (S, B*C)  f32
                  vmem,    # L          (S, S)    bf16
                  vmem,    # w1 kron    (K, B*C, B*H) bf16
                  vmem,    # w2 kron    (K, B*H, B*H) bf16
                  vmem,    # param pack (4, B*H)  f32
                  vmem,    # stat mats  (2, B*H, B*H) f32
                  smem],   # softmaxed switch-norm mixing weights (4,) f32
        out_specs=vmem,
    )(x_bl, prep["L"], prep["w1k"], prep["w2k"], prep["pack"],
      prep["stat_mats"], prep["sw"])

    # (S, B*H) lane-dense output, b-major columns -> (B, S, 1, H).
    return out.reshape(S, B, H).transpose(1, 0, 2)[:, :, None, :]


# ----------------------------------------------------------------------------
# Pure-JAX references (fp32, and bf16-dot-operand matched to the kernel)
# ----------------------------------------------------------------------------
def _switch_norm_ref(x2d, mean_w, var_w, gamma, beta, eps=1e-5):
    mw = jax.nn.softmax(mean_w)
    vw = jax.nn.softmax(var_w)
    mean_ln = jnp.mean(x2d, axis=1, keepdims=True)
    var_ln = jnp.var(x2d, axis=1, keepdims=True)
    mean_bn = jnp.mean(x2d, axis=0, keepdims=True)
    var_bn = jnp.var(x2d, axis=0, keepdims=True)
    mean = mw[0] * mean_ln + mw[1] * mean_bn
    var = vw[0] * var_ln + vw[1] * var_bn
    return (x2d - mean) / jnp.sqrt(var + eps) * gamma + beta


def _gconv_ref(x, L, W, b, K, act, cast):
    Lc = cast(L)
    lmul = lambda t: jnp.einsum("ij,bjc->bic", Lc, cast(t),
                                preferred_element_type=jnp.float32)
    T = [x]
    if K > 1:
        T.append(lmul(x))
    for _ in range(2, K):
        T.append(2.0 * lmul(T[-1]) - T[-2])
    out = b[0].astype(jnp.float32)
    for k in range(K):
        out = out + jnp.einsum("bsc,co->bso", cast(T[k]), cast(W[:, k, :]),
                               preferred_element_type=jnp.float32)
    if act:
        out = jnp.where(out >= 0, out, 0.01 * out)
    return out


def forward_ref(inputs, graph, params, K, *, bf16_dots):
    cast = (lambda a: a.astype(jnp.bfloat16)) if bf16_dots else (lambda a: a)
    B, S = inputs.shape[0], inputs.shape[1]
    x = inputs.reshape(B, S, -1).astype(jnp.float32)
    graph = graph if graph.ndim == 2 else graph.squeeze(0)
    L = graph_to_laplacian(graph.astype(jnp.float32))
    h1 = _gconv_ref(x, L, params["w1"], params["b1"], K, act=False, cast=cast)
    H = h1.shape[-1]
    y = _switch_norm_ref(h1.reshape(B * S, H), params["sn_mean_w"],
                         params["sn_var_w"], params["sn_gamma"],
                         params["sn_beta"])
    y = jnp.where(y >= 0, y, 0.01 * y).reshape(B, S, H)
    h2 = _gconv_ref(y, L, params["w2"], params["b2"], K, act=True, cast=cast)
    return h2[:, :, None, :]


# ----------------------------------------------------------------------------
# Main
# ----------------------------------------------------------------------------
if __name__ == "__main__":
    K = 3
    B, S = 2, 16             # batch, num_stations
    in_channel = 4           # flattened per-station features (2*2)
    hid = 32                 # hid_channel

    key = jax.random.PRNGKey(0)
    k_in, k_g, k_w1, k_b1, k_w2, k_b2 = jax.random.split(key, 6)

    # inputs: (B, S, 2, 2) -> viewed to (B, S, 4) inside forward
    inputs = jax.random.normal(k_in, (B, S, 2, 2), dtype=jnp.float32)

    # symmetric positive adjacency with self-loops (row sums > 0)
    g = jax.random.uniform(k_g, (S, S), dtype=jnp.float32)
    graph = 0.5 * (g + g.T) + jnp.eye(S, dtype=jnp.float32)

    params = {
        # graph_conv 1: in_channel -> hid; W[d, k, o] == torch Linear_d.weight[o, k]
        "w1": 0.3 * jax.random.normal(k_w1, (in_channel, K, hid), dtype=jnp.float32),
        "b1": jax.random.normal(k_b1, (1, hid), dtype=jnp.float32),
        # graph_conv 2: hid -> hid
        "w2": 0.1 * jax.random.normal(k_w2, (hid, K, hid), dtype=jnp.float32),
        "b2": jax.random.normal(k_b2, (1, hid), dtype=jnp.float32),
        # Switch_Norm_1D(hid) parameters (standard init)
        "sn_gamma": jnp.ones((1, hid), dtype=jnp.float32),
        "sn_beta": jnp.zeros((1, hid), dtype=jnp.float32),
        "sn_mean_w": jnp.ones((2,), dtype=jnp.float32),
        "sn_var_w": jnp.ones((2,), dtype=jnp.float32),
    }

    # One-time prep (Laplacian, weight kron, packing) -- not per forward.
    prep = prepare_merge_chebnet(params, graph, B, K=K)

    fwd = jax.jit(functools.partial(merge_chebnet_forward, K=K))
    out = jax.block_until_ready(fwd(inputs, prep))
    assert out.shape == (B, S, 1, hid), out.shape

    # Primary check: reference with the same bf16 rounding on dot operands.
    ref_bf16 = forward_ref(inputs, graph, params, K, bf16_dots=True)
    err_bf16 = float(jnp.max(jnp.abs(out - ref_bf16)))
    assert jnp.allclose(out, ref_bf16, atol=5e-3, rtol=1e-2), err_bf16

    # Sanity check vs. full-fp32 reference (bounded by bf16 MXU precision).
    ref_f32 = forward_ref(inputs, graph, params, K, bf16_dots=False)
    err_f32 = float(jnp.max(jnp.abs(out - ref_f32)))
    assert jnp.allclose(out, ref_f32, atol=0.25, rtol=0.1), err_f32

    print("KERNEL_OK")
</pallas_src>

<mosaic_0001>
module attributes {stable_mosaic.version = 11 : i64} {
  func.func @_fused_chebnet_kernel(%arg0: memref<16x8xf32, #tpu.memory_space<vmem>>, %arg1: memref<16x16xbf16, #tpu.memory_space<vmem>>, %arg2: memref<3x8x64xbf16, #tpu.memory_space<vmem>>, %arg3: memref<3x64x64xbf16, #tpu.memory_space<vmem>>, %arg4: memref<4x64xf32, #tpu.memory_space<vmem>>, %arg5: memref<2x64x64xf32, #tpu.memory_space<vmem>>, %arg6: memref<4xf32, #tpu.memory_space<smem>>, %arg7: memref<16x64xf32, #tpu.memory_space<vmem>>) attributes {dimension_semantics = [], scalar_prefetch = 0 : i64, scratch_operands = 0 : i64, tpu.core_type = #tpu.core_type<tc>} {
    %c0 = arith.constant 0 : index
    %c0_0 = arith.constant 0 : index
    %0 = vector.load %arg1[%c0, %c0_0] : memref<16x16xbf16, #tpu.memory_space<vmem>>, vector<16x16xbf16>
    %c0_1 = arith.constant 0 : index
    %c0_2 = arith.constant 0 : index
    %1 = vector.load %arg4[%c0_1, %c0_2] : memref<4x64xf32, #tpu.memory_space<vmem>>, vector<1x64xf32>
    %c1 = arith.constant 1 : index
    %c0_3 = arith.constant 0 : index
    %2 = vector.load %arg4[%c1, %c0_3] : memref<4x64xf32, #tpu.memory_space<vmem>>, vector<1x64xf32>
    %c2 = arith.constant 2 : index
    %c0_4 = arith.constant 0 : index
    %3 = vector.load %arg4[%c2, %c0_4] : memref<4x64xf32, #tpu.memory_space<vmem>>, vector<1x64xf32>
    %c3 = arith.constant 3 : index
    %c0_5 = arith.constant 0 : index
    %4 = vector.load %arg4[%c3, %c0_5] : memref<4x64xf32, #tpu.memory_space<vmem>>, vector<1x64xf32>
    %c0_6 = arith.constant 0 : index
    %c0_7 = arith.constant 0 : index
    %5 = vector.load %arg0[%c0_6, %c0_7] : memref<16x8xf32, #tpu.memory_space<vmem>>, vector<16x8xf32>
    %6 = arith.truncf %5 : vector<16x8xf32> to vector<16x8xbf16>
    %c0_8 = arith.constant 0 : index
    %c0_9 = arith.constant 0 : index
    %c0_10 = arith.constant 0 : index
    %7 = vector.load %arg2[%c0_8, %c0_9, %c0_10] : memref<3x8x64xbf16, #tpu.memory_space<vmem>>, vector<1x8x64xbf16>
    %8 = vector.shape_cast %7 : vector<1x8x64xbf16> to vector<8x64xbf16>
    %cst = arith.constant dense<0.000000e+00> : vector<16x64xf32>
    %9 = tpu.matmul %6, %8, %cst {dimension_numbers = #tpu.dot_dimension_numbers<[1], [0], [0], [1], [0, 0, 1, 1], [], []>} : vector<16x8xbf16>, vector<8x64xbf16>, vector<16x64xf32> -> vector<16x64xf32>
    %10 = arith.truncf %5 : vector<16x8xf32> to vector<16x8xbf16>
    %cst_11 = arith.constant dense<0.000000e+00> : vector<16x8xf32>
    %11 = tpu.matmul %0, %10, %cst_11 {dimension_numbers = #tpu.dot_dimension_numbers<[1], [0], [0], [1], [0, 0, 1, 1], [], []>} : vector<16x16xbf16>, vector<16x8xbf16>, vector<16x8xf32> -> vector<16x8xf32>
    %12 = arith.truncf %11 : vector<16x8xf32> to vector<16x8xbf16>
    %c1_12 = arith.constant 1 : index
    %c0_13 = arith.constant 0 : index
    %c0_14 = arith.constant 0 : index
    %13 = vector.load %arg2[%c1_12, %c0_13, %c0_14] : memref<3x8x64xbf16, #tpu.memory_space<vmem>>, vector<1x8x64xbf16>
    %14 = vector.shape_cast %13 : vector<1x8x64xbf16> to vector<8x64xbf16>
    %cst_15 = arith.constant dense<0.000000e+00> : vector<16x64xf32>
    %15 = tpu.matmul %12, %14, %cst_15 {dimension_numbers = #tpu.dot_dimension_numbers<[1], [0], [0], [1], [0, 0, 1, 1], [], []>} : vector<16x8xbf16>, vector<8x64xbf16>, vector<16x64xf32> -> vector<16x64xf32>
    %16 = arith.addf %9, %15 : vector<16x64xf32>
    %17 = arith.truncf %11 : vector<16x8xf32> to vector<16x8xbf16>
    %cst_16 = arith.constant dense<0.000000e+00> : vector<16x8xf32>
    %18 = tpu.matmul %0, %17, %cst_16 {dimension_numbers = #tpu.dot_dimension_numbers<[1], [0], [0], [1], [0, 0, 1, 1], [], []>} : vector<16x16xbf16>, vector<16x8xbf16>, vector<16x8xf32> -> vector<16x8xf32>
    %cst_17 = arith.constant 2.000000e+00 : f32
    %19 = vector.broadcast %cst_17 : f32 to vector<16x8xf32>
    %20 = arith.mulf %19, %18 : vector<16x8xf32>
    %21 = arith.subf %20, %5 : vector<16x8xf32>
    %22 = arith.truncf %21 : vector<16x8xf32> to vector<16x8xbf16>
    %c2_18 = arith.constant 2 : index
    %c0_19 = arith.constant 0 : index
    %c0_20 = arith.constant 0 : index
    %23 = vector.load %arg2[%c2_18, %c0_19, %c0_20] : memref<3x8x64xbf16, #tpu.memory_space<vmem>>, vector<1x8x64xbf16>
    %24 = vector.shape_cast %23 : vector<1x8x64xbf16> to vector<8x64xbf16>
    %cst_21 = arith.constant dense<0.000000e+00> : vector<16x64xf32>
    %25 = tpu.matmul %22, %24, %cst_21 {dimension_numbers = #tpu.dot_dimension_numbers<[1], [0], [0], [1], [0, 0, 1, 1], [], []>} : vector<16x8xbf16>, vector<8x64xbf16>, vector<16x64xf32> -> vector<16x64xf32>
    %26 = arith.addf %16, %25 : vector<16x64xf32>
    %27 = vector.broadcast %1 : vector<1x64xf32> to vector<16x64xf32>
    %28 = arith.addf %26, %27 : vector<16x64xf32>
    %c0_22 = arith.constant 0 : index
    %29 = memref.load %arg6[%c0_22] : memref<4xf32, #tpu.memory_space<smem>>
    %c1_23 = arith.constant 1 : index
    %30 = memref.load %arg6[%c1_23] : memref<4xf32, #tpu.memory_space<smem>>
    %c2_24 = arith.constant 2 : index
    %31 = memref.load %arg6[%c2_24] : memref<4xf32, #tpu.memory_space<smem>>
    %c3_25 = arith.constant 3 : index
    %32 = memref.load %arg6[%c3_25] : memref<4xf32, #tpu.memory_space<smem>>
    %c0_26 = arith.constant 0 : index
    %c0_27 = arith.constant 0 : index
    %c0_28 = arith.constant 0 : index
    %33 = vector.load %arg5[%c0_26, %c0_27, %c0_28] : memref<2x64x64xf32, #tpu.memory_space<vmem>>, vector<1x64x64xf32>
    %34 = vector.shape_cast %33 : vector<1x64x64xf32> to vector<64x64xf32>
    %c1_29 = arith.constant 1 : index
    %c0_30 = arith.constant 0 : index
    %c0_31 = arith.constant 0 : index
    %35 = vector.load %arg5[%c1_29, %c0_30, %c0_31] : memref<2x64x64xf32, #tpu.memory_space<vmem>>, vector<1x64x64xf32>
    %36 = vector.shape_cast %35 : vector<1x64x64xf32> to vector<64x64xf32>
    %cst_32 = arith.constant dense<0.000000e+00> : vector<16x64xf32>
    %37 = tpu.matmul %28, %34, %cst_32 {dimension_numbers = #tpu.dot_dimension_numbers<[1], [0], [0], [1], [0, 0, 1, 1], [], []>} : vector<16x64xf32>, vector<64x64xf32>, vector<16x64xf32> -> vector<16x64xf32>
    %38 = arith.subf %28, %37 : vector<16x64xf32>
    %39 = arith.mulf %38, %38 : vector<16x64xf32>
    %cst_33 = arith.constant dense<0.000000e+00> : vector<16x64xf32>
    %40 = tpu.matmul %39, %34, %cst_33 {dimension_numbers = #tpu.dot_dimension_numbers<[1], [0], [0], [1], [0, 0, 1, 1], [], []>} : vector<16x64xf32>, vector<64x64xf32>, vector<16x64xf32> -> vector<16x64xf32>
    %cst_34 = arith.constant dense<0.000000e+00> : vector<64xf32>
    %41 = vector.multi_reduction <add>, %28, %cst_34 [0] : vector<16x64xf32> to vector<64xf32>
    %42 = vector.shape_cast %41 : vector<64xf32> to vector<1x64xf32>
    %cst_35 = arith.constant dense<0.000000e+00> : vector<1x64xf32>
    %43 = tpu.matmul %42, %36, %cst_35 {dimension_numbers = #tpu.dot_dimension_numbers<[1], [0], [0], [1], [0, 0, 1, 1], [], []>} : vector<1x64xf32>, vector<64x64xf32>, vector<1x64xf32> -> vector<1x64xf32>
    %44 = vector.broadcast %43 : vector<1x64xf32> to vector<16x64xf32>
    %45 = arith.subf %28, %44 : vector<16x64xf32>
    %46 = arith.mulf %45, %45 : vector<16x64xf32>
    %cst_36 = arith.constant dense<0.000000e+00> : vector<64xf32>
    %47 = vector.multi_reduction <add>, %46, %cst_36 [0] : vector<16x64xf32> to vector<64xf32>
    %48 = vector.shape_cast %47 : vector<64xf32> to vector<1x64xf32>
    %cst_37 = arith.constant dense<0.000000e+00> : vector<1x64xf32>
    %49 = tpu.matmul %48, %36, %cst_37 {dimension_numbers = #tpu.dot_dimension_numbers<[1], [0], [0], [1], [0, 0, 1, 1], [], []>} : vector<1x64xf32>, vector<64x64xf32>, vector<1x64xf32> -> vector<1x64xf32>
    %50 = vector.broadcast %29 : f32 to vector<16x64xf32>
    %51 = arith.mulf %50, %37 : vector<16x64xf32>
    %52 = vector.broadcast %30 : f32 to vector<1x64xf32>
    %53 = arith.mulf %52, %43 : vector<1x64xf32>
    %54 = vector.broadcast %53 : vector<1x64xf32> to vector<16x64xf32>
    %55 = arith.addf %51, %54 : vector<16x64xf32>
    %56 = vector.broadcast %31 : f32 to vector<16x64xf32>
    %57 = arith.mulf %56, %40 : vector<16x64xf32>
    %58 = vector.broadcast %32 : f32 to vector<1x64xf32>
    %59 = arith.mulf %58, %49 : vector<1x64xf32>
    %60 = vector.broadcast %59 : vector<1x64xf32> to vector<16x64xf32>
    %61 = arith.addf %57, %60 : vector<16x64xf32>
    %62 = arith.subf %28, %55 : vector<16x64xf32>
    %cst_38 = arith.constant 9.99999974E-6 : f32
    %63 = vector.broadcast %cst_38 : f32 to vector<16x64xf32>
    %64 = arith.addf %61, %63 : vector<16x64xf32>
    %65 = math.rsqrt %64 : vector<16x64xf32>
    %66 = arith.mulf %62, %65 : vector<16x64xf32>
    %67 = vector.broadcast %3 : vector<1x64xf32> to vector<16x64xf32>
    %68 = arith.mulf %66, %67 : vector<16x64xf32>
    %69 = vector.broadcast %4 : vector<1x64xf32> to vector<16x64xf32>
    %70 = arith.addf %68, %69 : vector<16x64xf32>
    %cst_39 = arith.constant 0.000000e+00 : f32
    %71 = vector.broadcast %cst_39 : f32 to vector<16x64xf32>
    %72 = arith.cmpf oge, %70, %71 : vector<16x64xf32>
    %cst_40 = arith.constant 0.00999999977 : f32
    %73 = vector.broadcast %cst_40 : f32 to vector<16x64xf32>
    %74 = arith.mulf %73, %70 : vector<16x64xf32>
    %75 = arith.select %72, %70, %74 : vector<16x64xi1>, vector<16x64xf32>
    %76 = arith.truncf %75 : vector<16x64xf32> to vector<16x64xbf16>
    %c0_41 = arith.constant 0 : index
    %c0_42 = arith.constant 0 : index
    %c0_43 = arith.constant 0 : index
    %77 = vector.load %arg3[%c0_41, %c0_42, %c0_43] : memref<3x64x64xbf16, #tpu.memory_space<vmem>>, vector<1x64x64xbf16>
    %78 = vector.shape_cast %77 : vector<1x64x64xbf16> to vector<64x64xbf16>
    %cst_44 = arith.constant dense<0.000000e+00> : vector<16x64xf32>
    %79 = tpu.matmul %76, %78, %cst_44 {dimension_numbers = #tpu.dot_dimension_numbers<[1], [0], [0], [1], [0, 0, 1, 1], [], []>} : vector<16x64xbf16>, vector<64x64xbf16>, vector<16x64xf32> -> vector<16x64xf32>
    %80 = arith.truncf %75 : vector<16x64xf32> to vector<16x64xbf16>
    %cst_45 = arith.constant dense<0.000000e+00> : vector<16x64xf32>
    %81 = tpu.matmul %0, %80, %cst_45 {dimension_numbers = #tpu.dot_dimension_numbers<[1], [0], [0], [1], [0, 0, 1, 1], [], []>} : vector<16x16xbf16>, vector<16x64xbf16>, vector<16x64xf32> -> vector<16x64xf32>
    %82 = arith.truncf %81 : vector<16x64xf32> to vector<16x64xbf16>
    %c1_46 = arith.constant 1 : index
    %c0_47 = arith.constant 0 : index
    %c0_48 = arith.constant 0 : index
    %83 = vector.load %arg3[%c1_46, %c0_47, %c0_48] : memref<3x64x64xbf16, #tpu.memory_space<vmem>>, vector<1x64x64xbf16>
    %84 = vector.shape_cast %83 : vector<1x64x64xbf16> to vector<64x64xbf16>
    %cst_49 = arith.constant dense<0.000000e+00> : vector<16x64xf32>
    %85 = tpu.matmul %82, %84, %cst_49 {dimension_numbers = #tpu.dot_dimension_numbers<[1], [0], [0], [1], [0, 0, 1, 1], [], []>} : vector<16x64xbf16>, vector<64x64xbf16>, vector<16x64xf32> -> vector<16x64xf32>
    %86 = arith.addf %79, %85 : vector<16x64xf32>
    %87 = arith.truncf %81 : vector<16x64xf32> to vector<16x64xbf16>
    %cst_50 = arith.constant dense<0.000000e+00> : vector<16x64xf32>
    %88 = tpu.matmul %0, %87, %cst_50 {dimension_numbers = #tpu.dot_dimension_numbers<[1], [0], [0], [1], [0, 0, 1, 1], [], []>} : vector<16x16xbf16>, vector<16x64xbf16>, vector<16x64xf32> -> vector<16x64xf32>
    %cst_51 = arith.constant 2.000000e+00 : f32
    %89 = vector.broadcast %cst_51 : f32 to vector<16x64xf32>
    %90 = arith.mulf %89, %88 : vector<16x64xf32>
    %91 = arith.subf %90, %75 : vector<16x64xf32>
    %92 = arith.truncf %91 : vector<16x64xf32> to vector<16x64xbf16>
    %c2_52 = arith.constant 2 : index
    %c0_53 = arith.constant 0 : index
    %c0_54 = arith.constant 0 : index
    %93 = vector.load %arg3[%c2_52, %c0_53, %c0_54] : memref<3x64x64xbf16, #tpu.memory_space<vmem>>, vector<1x64x64xbf16>
    %94 = vector.shape_cast %93 : vector<1x64x64xbf16> to vector<64x64xbf16>
    %cst_55 = arith.constant dense<0.000000e+00> : vector<16x64xf32>
    %95 = tpu.matmul %92, %94, %cst_55 {dimension_numbers = #tpu.dot_dimension_numbers<[1], [0], [0], [1], [0, 0, 1, 1], [], []>} : vector<16x64xbf16>, vector<64x64xbf16>, vector<16x64xf32> -> vector<16x64xf32>
    %96 = arith.addf %86, %95 : vector<16x64xf32>
    %97 = vector.broadcast %2 : vector<1x64xf32> to vector<16x64xf32>
    %98 = arith.addf %96, %97 : vector<16x64xf32>
    %cst_56 = arith.constant 0.000000e+00 : f32
    %99 = vector.broadcast %cst_56 : f32 to vector<16x64xf32>
    %100 = arith.cmpf oge, %98, %99 : vector<16x64xf32>
    %cst_57 = arith.constant 0.00999999977 : f32
    %101 = vector.broadcast %cst_57 : f32 to vector<16x64xf32>
    %102 = arith.mulf %101, %98 : vector<16x64xf32>
    %103 = arith.select %100, %98, %102 : vector<16x64xi1>, vector<16x64xf32>
    %c0_58 = arith.constant 0 : index
    %c0_59 = arith.constant 0 : index
    %104 = vector.load %arg7[%c0_58, %c0_59] : memref<16x64xf32, #tpu.memory_space<vmem>>, vector<16x64xf32>
    tpu.vector_store %arg7[%c0_58, %c0_59], %103 {strides = array<i32>} : memref<16x64xf32, #tpu.memory_space<vmem>>, vector<16x64xf32>,
    return
  }
}

</mosaic_0001>

<llo_original>
// kernel: merge_chebnet_forward.1
$region0: #{merge_chebnet_forward.1}
  #allocation0 [shape = 'u32[]', space=smem, size = 0x4, offset = 0x4, fixed_abs, tag = 'smem constant byte address 0x4 - core index']
  #allocation1 [shape = 'u32[144,128]{1,0:T(1,128)}', space=vmem, size = 0x12000, scoped, tag = 'internal scratch']
  %s0 = inlined_call_operand.vmem [shape: f32[16,8], index: 0, kind: input, shape index: {}]
  %s1 = inlined_call_operand.vmem [shape: bf16[16,16], index: 1, kind: input, shape index: {}]
  %s2 = inlined_call_operand.vmem [shape: bf16[3,8,64], index: 2, kind: input, shape index: {}]
  %s3 = inlined_call_operand.hbm [shape: bf16[3,64,64], index: 3, kind: input, shape index: {}]
  %s4 = inlined_call_operand.vmem [shape: f32[4,64], index: 4, kind: input, shape index: {}]
  %s5 = inlined_call_operand.hbm [shape: f32[2,64,64], index: 5, kind: input, shape index: {}]
  %s6 = inlined_call_operand.vmem [shape: f32[4], index: 6, kind: input, shape index: {}]
  %s7 = inlined_call_operand.vmem [shape: f32[16,64], index: 7, kind: output, shape index: {}]
  %s8 = sld [smem:[#allocation0]]
  $region50: #{merge_chebnet_forward.1} parent=0
    _
  %s10 = ssub.s32 1, %s8
  %s11 = scalar_select 0, %s10, %s8
  $region1: #{merge_chebnet_forward.1} parent=0
    #allocation2 [shape = 'u8[49152]{0}', space=vmem, size = 0xc000, scoped, tag = 'input window, operand 3, single buffered']
    #allocation3 [shape = 's32[1]{0}', space=sflag, size = 0x4, scoped, tag = 'scoped memory for merge_chebnet_forward.1']
    #allocation4 [shape = 's32[1]{0}', space=sflag, size = 0x4, scoped, tag = 'scoped memory for merge_chebnet_forward.1']
    #allocation5 [shape = 'u8[65536]{0}', space=vmem, size = 0x10000, scoped, tag = 'input window, operand 5, single buffered']
    #allocation6 [shape = 's32[1]{0}', space=sflag, size = 0x4, scoped, tag = 'scoped memory for merge_chebnet_forward.1']
    #allocation7 [shape = 'u8[512]{0}', space=smem, size = 0x200, scoped, tag = 'input window, operand 6, single buffered']
    %12 = vsyncpa [#allocation3], 0
    %13 = vsyncpa [#allocation6], 0
    %14 = vsyncpa [#allocation4], 0
    // Predicated region
    $region2: #{merge_chebnet_forward.1} parent=1 // pred_check
      _
    $region3: #{merge_chebnet_forward.1} parent=1 // pred_check_branch
      %16 = sbr.rel (0) target = $region5
    $region4: #{merge_chebnet_forward.1} parent=1 // pred_region
      _
    $region5: #{merge_chebnet_forward.1} parent=1 // pred_fallthru
      _
    // Predicated region
    $region6: #{merge_chebnet_forward.1} parent=1 // pred_check
      _
    $region7: #{merge_chebnet_forward.1} parent=1 // pred_check_branch
      %18 = sbr.rel (0) target = $region9
    $region8: #{merge_chebnet_forward.1} parent=1 // pred_region
      _
    $region9: #{merge_chebnet_forward.1} parent=1 // pred_fallthru
      _
    // Predicated region
    $region10: #{merge_chebnet_forward.1} parent=1 // pred_check
      _
    $region11: #{merge_chebnet_forward.1} parent=1 // pred_check_branch
      %20 = sbr.rel (0) target = $region13
    $region12: #{merge_chebnet_forward.1} parent=1 // pred_region
      _
    $region13: #{merge_chebnet_forward.1} parent=1 // pred_fallthru
      _
    // Predicated region
    $region14: #{merge_chebnet_forward.1} parent=1 // pred_check
      _
    $region15: #{merge_chebnet_forward.1} parent=1 // pred_check_branch
      %22 = sbr.rel (0) target = $region17
    $region16: #{merge_chebnet_forward.1} parent=1 // pred_region
      %s24 = ssub.s32 1536, 1536
      %25 = vsyncadd [#allocation3], %s24
      %s26 = sshll.u32 [#allocation2], 4
      %s27 = int_to_ptr.vmem [resolvable:$true] %s26
      %32 = dma.hbm_to_vmem [thread:$0]  %s3, 1536, %s27, [#allocation3], 64, 64, 4
    $region17: #{merge_chebnet_forward.1} parent=1 // pred_fallthru
      _
    // Predicated region
    $region18: #{merge_chebnet_forward.1} parent=1 // pred_check
      _
    $region19: #{merge_chebnet_forward.1} parent=1 // pred_check_branch
      %34 = sbr.rel (0) target = $region21
    $region20: #{merge_chebnet_forward.1} parent=1 // pred_region
      _
    $region21: #{merge_chebnet_forward.1} parent=1 // pred_fallthru
      _
    // Predicated region
    $region22: #{merge_chebnet_forward.1} parent=1 // pred_check
      _
    $region23: #{merge_chebnet_forward.1} parent=1 // pred_check_branch
      %36 = sbr.rel (0) target = $region25
    $region24: #{merge_chebnet_forward.1} parent=1 // pred_region
      %s38 = ssub.s32 2048, 2048
      %39 = vsyncadd [#allocation6], %s38
      %s40 = sshll.u32 [#allocation5], 4
      %s41 = int_to_ptr.vmem [resolvable:$true] %s40
      %46 = dma.hbm_to_vmem [thread:$0]  %s5, 2048, %s41, [#allocation6], 128, 128, 8
    $region25: #{merge_chebnet_forward.1} parent=1 // pred_fallthru
      _
    // Predicated region
    $region26: #{merge_chebnet_forward.1} parent=1 // pred_check
      _
    $region27: #{merge_chebnet_forward.1} parent=1 // pred_check_branch
      %48 = sbr.rel (0) target = $region29
    $region28: #{merge_chebnet_forward.1} parent=1 // pred_region
      %s50 = ssub.s32 16, 16
      %51 = vsyncadd [#allocation4], %s50
      %s53 = sshll.u32 %s6, 4
      %s54 = int_to_ptr.vmem [resolvable:$true] %s53
      %56 = dma.vmem_to_smem %s54, 16, [#allocation7], [#allocation4]
    $region29: #{merge_chebnet_forward.1} parent=1 // pred_fallthru
      _
    // Predicated region
    $region30: #{merge_chebnet_forward.1} parent=1 // pred_check
      _
    $region31: #{merge_chebnet_forward.1} parent=1 // pred_check_branch
      %58 = sbr.rel (0) target = $region33
    $region32: #{merge_chebnet_forward.1} parent=1 // pred_region
      %59 = dma.done [#allocation3], 1536
    $region33: #{merge_chebnet_forward.1} parent=1 // pred_fallthru
      _
    // Predicated region
    $region34: #{merge_chebnet_forward.1} parent=1 // pred_check
      _
    $region35: #{merge_chebnet_forward.1} parent=1 // pred_check_branch
      %61 = sbr.rel (0) target = $region37
    $region36: #{merge_chebnet_forward.1} parent=1 // pred_region
      %62 = dma.done [#allocation6], 2048
    $region37: #{merge_chebnet_forward.1} parent=1 // pred_fallthru
      _
    // Predicated region
    $region38: #{merge_chebnet_forward.1} parent=1 // pred_check
      _
    $region39: #{merge_chebnet_forward.1} parent=1 // pred_check_branch
      %64 = sbr.rel (0) target = $region41
    $region40: #{merge_chebnet_forward.1} parent=1 // pred_region
      %65 = dma.done [#allocation4], 16
    $region41: #{merge_chebnet_forward.1} parent=1 // pred_fallthru
      _
    %66 = sfence
    %v68 = vld [vmem:[%s1] sm:$0xf]
    %v69 = vld [vmem:[%s1 + $0x4] sm:$0xf]
    %v70 = vld [vmem:[%s4] sm:$0x1]
    %v71 = vld [vmem:[%s4 + $0x1] sm:$0x1]
    %v72 = vld [vmem:[%s4 + $0x2] sm:$0x1]
    %v73 = vld [vmem:[%s4 + $0x3] sm:$0x1]
    %v74 = vld [vmem:[%s0] sm:$0xff]
    %v75 = vld [vmem:[%s0 + $0x8] sm:$0xff]
    %v76 = vpack.c.bf16 %v75, %v74
    %v77 = vld [vmem:[%s2] sm:$0xf]
    %v80 = vunpack.c.l.b16 %v68
    %v81 = vunpack.c.l.b16 %v69
    %v82 = vpack.c.b16 %v81, %v80
    %vm83 = vcmask 130048
    %v85 = vsel %vm83, %v82, 0
    %87 = vmatprep.subr.bf16.mxu0 0
    %88 = vmatpush1.bf16.msra.mxu0 %v76
    %89 = vmatprep.subr.bf16.mxu0 0
    %90 = vmatpush1.bf16.msra.mxu0 0
    %91 = vmatprep.subr.bf16.mxu0 0
    %92 = vmatpush1.bf16.msra.mxu0 0
    %93 = vmatprep.subr.bf16.mxu0 0
    %94 = vmatpush1.bf16.msra.mxu0 0
    %95 = vmatprep.subr.bf16.mxu0 0
    %96 = vmatpush1.bf16.msra.mxu0 0
    %97 = vmatprep.subr.bf16.mxu0 0
    %98 = vmatpush1.bf16.msra.mxu0 0
    %99 = vmatprep.subr.bf16.mxu0 0
    %100 = vmatpush1.bf16.msra.mxu0 0
    %101 = vmatprep.subr.bf16.mxu0 0
    %102 = vmatpush1.bf16.msra.mxu0 0
    %103 = vmatprep.subr.bf16.mxu0 0
    %104 = vmatpush1.bf16.msra.mxu0 0
    %105 = vmatprep.subr.bf16.mxu0 0
    %106 = vmatpush1.bf16.msra.mxu0 0
    %107 = vmatprep.subr.bf16.mxu0 0
    %108 = vmatpush1.bf16.msra.mxu0 0
    %109 = vmatprep.subr.bf16.mxu0 0
    %110 = vmatpush1.bf16.msra.mxu0 0
    %111 = vmatprep.subr.bf16.mxu0 0
    %112 = vmatpush1.bf16.msra.mxu0 0
    %113 = vmatprep.subr.bf16.mxu0 0
    %114 = vmatpush1.bf16.msra.mxu0 0
    %115 = vmatprep.subr.bf16.mxu0 0
    %116 = vmatpush1.bf16.msra.mxu0 0
    %117 = vmatprep.subr.bf16.mxu0 0
    %118 = vmatpush1.bf16.msra.mxu0 0
    %119 = vmatprep.mubr.bf16.mxu0 0
    %120 = vmatmul.mubr.bf16.gmra.mrb[0].mxu0 %v85
    %v121 = vpop.f32.mrb[0].mxu0
    %v122 = vadd.f32 0.0, %v121
    %v123 = vpop.f32.mrb[0].mxu0
    %v124 = vpop.f32.mrb[0].mxu0
    %v125 = vadd.f32 0.0, %v124
    %v126 = vpop.f32.mrb[0].mxu0
    %127 = vdwg.mxu0
    %v128 = vpack.c.bf16 %v125, %v122
    %s129 = scalar_lea.vmem %s2, 4
    %v130 = vld [vmem:[%s129] sm:$0xf]
    %vm131 = vcmask 64512
    %v133 = vsel %vm131, %v128, 0
    %vm135 = vcmask 1043456
    %v137 = vsel %vm135, %v130, 0
    %139 = vmatprep.subr.bf16.mxu0 0
    %140 = vmatpush1.bf16.msra.mxu0 %v137
    %141 = vmatprep.subr.bf16.mxu0 0
    %142 = vmatpush1.bf16.msra.mxu0 0
    %143 = vmatprep.subr.bf16.mxu0 0
    %144 = vmatpush1.bf16.msra.mxu0 0
    %145 = vmatprep.subr.bf16.mxu0 0
    %146 = vmatpush1.bf16.msra.mxu0 0
    %147 = vmatprep.subr.bf16.mxu0 0
    %148 = vmatpush1.bf16.msra.mxu0 0
    %149 = vmatprep.subr.bf16.mxu0 0
    %150 = vmatpush1.bf16.msra.mxu0 0
    %151 = vmatprep.subr.bf16.mxu0 0
    %152 = vmatpush1.bf16.msra.mxu0 0
    %153 = vmatprep.subr.bf16.mxu0 0
    %154 = vmatpush1.bf16.msra.mxu0 0
    %155 = vmatprep.subr.bf16.mxu0 0
    %156 = vmatpush1.bf16.msra.mxu0 0
    %157 = vmatprep.subr.bf16.mxu0 0
    %158 = vmatpush1.bf16.msra.mxu0 0
    %159 = vmatprep.subr.bf16.mxu0 0
    %160 = vmatpush1.bf16.msra.mxu0 0
    %161 = vmatprep.subr.bf16.mxu0 0
    %162 = vmatpush1.bf16.msra.mxu0 0
    %163 = vmatprep.subr.bf16.mxu0 0
    %164 = vmatpush1.bf16.msra.mxu0 0
    %165 = vmatprep.subr.bf16.mxu0 0
    %166 = vmatpush1.bf16.msra.mxu0 0
    %167 = vmatprep.subr.bf16.mxu0 0
    %168 = vmatpush1.bf16.msra.mxu0 0
    %169 = vmatprep.subr.bf16.mxu0 0
    %170 = vmatpush1.bf16.msra.mxu0 0
    %171 = vmatprep.mubr.bf16.mxu0 0
    %172 = vmatmul.mubr.bf16.gmra.mrb[0].mxu0 %v133
    %v173 = vpop.f32.mrb[0].mxu0
    %v174 = vadd.f32 0.0, %v173
    %v175 = vpop.f32.mrb[0].mxu0
    %v176 = vpop.f32.mrb[0].mxu0
    %v177 = vadd.f32 0.0, %v176
    %v178 = vpop.f32.mrb[0].mxu0
    %179 = vdwg.mxu0
    %v181 = vsel %vm131, %v76, 0
    %v184 = vsel %vm135, %v77, 0
    %186 = vmatprep.subr.bf16.mxu0 0
    %187 = vmatpush1.bf16.msra.mxu0 %v184
    %188 = vmatprep.subr.bf16.mxu0 0
    %189 = vmatpush1.bf16.msra.mxu0 0
    %190 = vmatprep.subr.bf16.mxu0 0
    %191 = vmatpush1.bf16.msra.mxu0 0
    %192 = vmatprep.subr.bf16.mxu0 0
    %193 = vmatpush1.bf16.msra.mxu0 0
    %194 = vmatprep.subr.bf16.mxu0 0
    %195 = vmatpush1.bf16.msra.mxu0 0
    %196 = vmatprep.subr.bf16.mxu0 0
    %197 = vmatpush1.bf16.msra.mxu0 0
    %198 = vmatprep.subr.bf16.mxu0 0
    %199 = vmatpush1.bf16.msra.mxu0 0
    %200 = vmatprep.subr.bf16.mxu0 0
    %201 = vmatpush1.bf16.msra.mxu0 0
    %202 = vmatprep.subr.bf16.mxu0 0
    %203 = vmatpush1.bf16.msra.mxu0 0
    %204 = vmatprep.subr.bf16.mxu0 0
    %205 = vmatpush1.bf16.msra.mxu0 0
    %206 = vmatprep.subr.bf16.mxu0 0
    %207 = vmatpush1.bf16.msra.mxu0 0
    %208 = vmatprep.subr.bf16.mxu0 0
    %209 = vmatpush1.bf16.msra.mxu0 0
    %210 = vmatprep.subr.bf16.mxu0 0
    %211 = vmatpush1.bf16.msra.mxu0 0
    %212 = vmatprep.subr.bf16.mxu0 0
    %213 = vmatpush1.bf16.msra.mxu0 0
    %214 = vmatprep.subr.bf16.mxu0 0
    %215 = vmatpush1.bf16.msra.mxu0 0
    %216 = vmatprep.subr.bf16.mxu0 0
    %217 = vmatpush1.bf16.msra.mxu0 0
    %218 = vmatprep.mubr.bf16.mxu0 0
    %219 = vmatmul.mubr.bf16.gmra.mrb[0].mxu0 %v181
    %v220 = vpop.f32.mrb[0].mxu0
    %v221 = vadd.f32 %v174, %v220
    %v222 = vpop.f32.mrb[0].mxu0
    %v223 = vpop.f32.mrb[0].mxu0
    %v224 = vadd.f32 %v177, %v223
    %v225 = vpop.f32.mrb[0].mxu0
    %226 = vdwg.mxu0
    %227 = vmatprep.subr.bf16.mxu0 0
    %228 = vmatpush1.bf16.msra.mxu0 %v128
    %229 = vmatprep.subr.bf16.mxu0 0
    %230 = vmatpush1.bf16.msra.mxu0 0
    %231 = vmatprep.subr.bf16.mxu0 0
    %232 = vmatpush1.bf16.msra.mxu0 0
    %233 = vmatprep.subr.bf16.mxu0 0
    %234 = vmatpush1.bf16.msra.mxu0 0
    %235 = vmatprep.subr.bf16.mxu0 0
    %236 = vmatpush1.bf16.msra.mxu0 0
    %237 = vmatprep.subr.bf16.mxu0 0
    %238 = vmatpush1.bf16.msra.mxu0 0
    %239 = vmatprep.subr.bf16.mxu0 0
    %240 = vmatpush1.bf16.msra.mxu0 0
    %241 = vmatprep.subr.bf16.mxu0 0
    %242 = vmatpush1.bf16.msra.mxu0 0
    %243 = vmatprep.subr.bf16.mxu0 0
    %244 = vmatpush1.bf16.msra.mxu0 0
    %245 = vmatprep.subr.bf16.mxu0 0
    %246 = vmatpush1.bf16.msra.mxu0 0
    %247 = vmatprep.subr.bf16.mxu0 0
    %248 = vmatpush1.bf16.msra.mxu0 0
    %249 = vmatprep.subr.bf16.mxu0 0
    %250 = vmatpush1.bf16.msra.mxu0 0
    %251 = vmatprep.subr.bf16.mxu0 0
    %252 = vmatpush1.bf16.msra.mxu0 0
    %253 = vmatprep.subr.bf16.mxu0 0
    %254 = vmatpush1.bf16.msra.mxu0 0
    %255 = vmatprep.subr.bf16.mxu0 0
    %256 = vmatpush1.bf16.msra.mxu0 0
    %257 = vmatprep.subr.bf16.mxu0 0
    %258 = vmatpush1.bf16.msra.mxu0 0
    %259 = vmatprep.mubr.bf16.mxu0 0
    %260 = vmatmul.mubr.bf16.gmra.mrb[0].mxu0 %v85
    %v261 = vpop.f32.mrb[0].mxu0
    %v262 = vadd.f32 0.0, %v261
    %v263 = vpop.f32.mrb[0].mxu0
    %v264 = vpop.f32.mrb[0].mxu0
    %v265 = vadd.f32 0.0, %v264
    %v266 = vpop.f32.mrb[0].mxu0
    %267 = vdwg.mxu0
    %v268 = vmul.f32 %v262, 2.0
    %v269 = vmul.f32 %v265, 2.0
    %v270 = vsub.f32 %v268, %v74
    %v271 = vsub.f32 %v269, %v75
    %v272 = vpack.c.bf16 %v271, %v270
    %s273 = scalar_lea.vmem %s2, 8
    %v274 = vld [vmem:[%s273] sm:$0xf]
    %v276 = vsel %vm131, %v272, 0
    %v279 = vsel %vm135, %v274, 0
    %281 = vmatprep.subr.bf16.mxu0 0
    %282 = vmatpush1.bf16.msra.mxu0 %v279
    %283 = vmatprep.subr.bf16.mxu0 0
    %284 = vmatpush1.bf16.msra.mxu0 0
    %285 = vmatprep.subr.bf16.mxu0 0
    %286 = vmatpush1.bf16.msra.mxu0 0
    %287 = vmatprep.subr.bf16.mxu0 0
    %288 = vmatpush1.bf16.msra.mxu0 0
    %289 = vmatprep.subr.bf16.mxu0 0
    %290 = vmatpush1.bf16.msra.mxu0 0
    %291 = vmatprep.subr.bf16.mxu0 0
    %292 = vmatpush1.bf16.msra.mxu0 0
    %293 = vmatprep.subr.bf16.mxu0 0
    %294 = vmatpush1.bf16.msra.mxu0 0
    %295 = vmatprep.subr.bf16.mxu0 0
    %296 = vmatpush1.bf16.msra.mxu0 0
    %297 = vmatprep.subr.bf16.mxu0 0
    %298 = vmatpush1.bf16.msra.mxu0 0
    %299 = vmatprep.subr.bf16.mxu0 0
    %300 = vmatpush1.bf16.msra.mxu0 0
    %301 = vmatprep.subr.bf16.mxu0 0
    %302 = vmatpush1.bf16.msra.mxu0 0
    %303 = vmatprep.subr.bf16.mxu0 0
    %304 = vmatpush1.bf16.msra.mxu0 0
    %305 = vmatprep.subr.bf16.mxu0 0
    %306 = vmatpush1.bf16.msra.mxu0 0
    %307 = vmatprep.subr.bf16.mxu0 0
    %308 = vmatpush1.bf16.msra.mxu0 0
    %309 = vmatprep.subr.bf16.mxu0 0
    %310 = vmatpush1.bf16.msra.mxu0 0
    %311 = vmatprep.subr.bf16.mxu0 0
    %312 = vmatpush1.bf16.msra.mxu0 0
    %313 = vmatprep.mubr.bf16.mxu0 0
    %314 = vmatmul.mubr.bf16.gmra.mrb[0].mxu0 %v276
    %v315 = vpop.f32.mrb[0].mxu0
    %v316 = vadd.f32 0.0, %v315
    %v317 = vpop.f32.mrb[0].mxu0
    %v318 = vpop.f32.mrb[0].mxu0
    %v319 = vadd.f32 0.0, %v318
    %v320 = vpop.f32.mrb[0].mxu0
    %321 = vdwg.mxu0
    %v322 = vadd.f32 %v221, %v316
    %v323 = vadd.f32 %v224, %v319
    %v324 = vlaneseq
    %v325 = vshrl.u32 %v324, 7
    %v326 = vsub.s32 0, %v325
    %v327 = vrot.slane %v70, %v326
    %v328 = vadd.f32 %v322, %v327
    %v329 = vadd.f32 %v323, %v327
    %s330 = sld [smem:[#allocation7]]
    %s331 = sld [smem:[#allocation7 + $0x1]]
    %s332 = sld [smem:[#allocation7 + $0x2]]
    %s333 = sld [smem:[#allocation7 + $0x3]]
    %v334 = vld [vmem:[#allocation5] sm:$0xff]
    %v335 = vld [vmem:[#allocation5 + $0x8] sm:$0xff]
    %v336 = vld [vmem:[#allocation5 + $0x10] sm:$0xff]
    %v337 = vld [vmem:[#allocation5 + $0x18] sm:$0xff]
    %v338 = vld [vmem:[#allocation5 + $0x20] sm:$0xff]
    %v339 = vld [vmem:[#allocation5 + $0x28] sm:$0xff]
    %v340 = vld [vmem:[#allocation5 + $0x30] sm:$0xff]
    %v341 = vld [vmem:[#allocation5 + $0x38] sm:$0xff]
    %s342 = scalar_lea.vmem [#allocation5], 64
    %v343 = vld [vmem:[%s342] sm:$0xff]
    %v344 = vld [vmem:[%s342 + $0x8] sm:$0xff]
    %v345 = vld [vmem:[%s342 + $0x10] sm:$0xff]
    %v346 = vld [vmem:[%s342 + $0x18] sm:$0xff]
    %v347 = vld [vmem:[%s342 + $0x20] sm:$0xff]
    %v348 = vld [vmem:[%s342 + $0x28] sm:$0xff]
    %v349 = vld [vmem:[%s342 + $0x30] sm:$0xff]
    %v350 = vld [vmem:[%s342 + $0x38] sm:$0xff]
    %vm351 = vcmask 523264
    %v353 = vsel %vm351, %v328, 0
    %v356 = vsel %vm351, %v329, 0
    %358 = vmatprep.subr.mxu0 0.0
    %359 = vmatpush1.msra.mxu0 %v334
    %360 = vmatprep.subr.mxu0 0.0
    %361 = vmatpush1.msra.mxu0 %v335
    %362 = vmatprep.subr.mxu0 0.0
    %363 = vmatpush1.msra.mxu0 %v336
    %364 = vmatprep.subr.mxu0 0.0
    %365 = vmatpush1.msra.mxu0 %v337
    %366 = vmatprep.subr.mxu0 0.0
    %367 = vmatpush1.msra.mxu0 %v338
    %368 = vmatprep.subr.mxu0 0.0
    %369 = vmatpush1.msra.mxu0 %v339
    %370 = vmatprep.subr.mxu0 0.0
    %371 = vmatpush1.msra.mxu0 %v340
    %372 = vmatprep.subr.mxu0 0.0
    %373 = vmatpush1.msra.mxu0 %v341
    %374 = vmatprep.subr.mxu0 0.0
    %375 = vmatpush1.msra.mxu0 0.0
    %376 = vmatprep.subr.mxu0 0.0
    %377 = vmatpush1.msra.mxu0 0.0
    %378 = vmatprep.subr.mxu0 0.0
    %379 = vmatpush1.msra.mxu0 0.0
    %380 = vmatprep.subr.mxu0 0.0
    %381 = vmatpush1.msra.mxu0 0.0
    %382 = vmatprep.subr.mxu0 0.0
    %383 = vmatpush1.msra.mxu0 0.0
    %384 = vmatprep.subr.mxu0 0.0
    %385 = vmatpush1.msra.mxu0 0.0
    %386 = vmatprep.subr.mxu0 0.0
    %387 = vmatpush1.msra.mxu0 0.0
    %388 = vmatprep.subr.mxu0 0.0
    %389 = vmatpush1.msra.mxu0 0.0
    %390 = vmatprep.subr.mxu0 0.0
    %391 = vmatpush1.msra.mxu0 0.0
    %392 = vmatprep.subr.mxu0 0.0
    %393 = vmatpush1.msra.mxu0 0.0
    %394 = vmatprep.subr.mxu0 0.0
    %395 = vmatpush1.msra.mxu0 0.0
    %396 = vmatprep.subr.mxu0 0.0
    %397 = vmatpush1.msra.mxu0 0.0
    %398 = vmatprep.subr.mxu0 0.0
    %399 = vmatpush1.msra.mxu0 0.0
    %400 = vmatprep.subr.mxu0 0.0
    %401 = vmatpush1.msra.mxu0 0.0
    %402 = vmatprep.subr.mxu0 0.0
    %403 = vmatpush1.msra.mxu0 0.0
    %404 = vmatprep.subr.mxu0 0.0
    %405 = vmatpush1.msra.mxu0 0.0
    %406 = vmatprep.subr.mxu0 0.0
    %407 = vmatpush1.msra.mxu0 0.0
    %408 = vmatprep.subr.mxu0 0.0
    %409 = vmatpush1.msra.mxu0 0.0
    %410 = vmatprep.subr.mxu0 0.0
    %411 = vmatpush1.msra.mxu0 0.0
    %412 = vmatprep.subr.mxu0 0.0
    %413 = vmatpush1.msra.mxu0 0.0
    %414 = vmatprep.subr.mxu0 0.0
    %415 = vmatpush1.msra.mxu0 0.0
    %416 = vmatprep.subr.mxu0 0.0
    %417 = vmatpush1.msra.mxu0 0.0
    %418 = vmatprep.subr.mxu0 0.0
    %419 = vmatpush1.msra.mxu0 0.0
    %420 = vmatprep.subr.mxu0 0.0
    %421 = vmatpush1.msra.mxu0 0.0
    %422 = vmatprep.mubr.f32.mxu0 0.0
    %423 = vmatmul.mubr.f32.gmra.mrb[0].mxu0 %v353
    %v424 = vpop.f32.mrb[0].mxu0
    %v425 = vadd.f32 0.0, %v424
    %v426 = vpop.f32.mrb[0].mxu0
    %427 = vmatprep.mubr.f32.mxu0 0.0
    %428 = vmatmul.mubr.f32.gmra.mrb[0].mxu0 %v356
    %v429 = vpop.f32.mrb[0].mxu0
    %v430 = vadd.f32 0.0, %v429
    %v431 = vpop.f32.mrb[0].mxu0
    %432 = vdwg.mxu0
    %v433 = vsub.f32 %v328, %v425
    %v434 = vsub.f32 %v329, %v430
    %v435 = vmul.f32 %v433, %v433
    %v436 = vmul.f32 %v434, %v434
    %v438 = vsel %vm351, %v435, 0
    %v441 = vsel %vm351, %v436, 0
    %443 = vmatprep.subr.mxu0 0.0
    %444 = vmatpush1.msra.mxu0 %v334
    %445 = vmatprep.subr.mxu0 0.0
    %446 = vmatpush1.msra.mxu0 %v335
    %447 = vmatprep.subr.mxu0 0.0
    %448 = vmatpush1.msra.mxu0 %v336
    %449 = vmatprep.subr.mxu0 0.0
    %450 = vmatpush1.msra.mxu0 %v337
    %451 = vmatprep.subr.mxu0 0.0
    %452 = vmatpush1.msra.mxu0 %v338
    %453 = vmatprep.subr.mxu0 0.0
    %454 = vmatpush1.msra.mxu0 %v339
    %455 = vmatprep.subr.mxu0 0.0
    %456 = vmatpush1.msra.mxu0 %v340
    %457 = vmatprep.subr.mxu0 0.0
    %458 = vmatpush1.msra.mxu0 %v341
    %459 = vmatprep.subr.mxu0 0.0
    %460 = vmatpush1.msra.mxu0 0.0
    %461 = vmatprep.subr.mxu0 0.0
    %462 = vmatpush1.msra.mxu0 0.0
    %463 = vmatprep.subr.mxu0 0.0
    %464 = vmatpush1.msra.mxu0 0.0
    %465 = vmatprep.subr.mxu0 0.0
    %466 = vmatpush1.msra.mxu0 0.0
    %467 = vmatprep.subr.mxu0 0.0
    %468 = vmatpush1.msra.mxu0 0.0
    %469 = vmatprep.subr.mxu0 0.0
    %470 = vmatpush1.msra.mxu0 0.0
    %471 = vmatprep.subr.mxu0 0.0
    %472 = vmatpush1.msra.mxu0 0.0
    %473 = vmatprep.subr.mxu0 0.0
    %474 = vmatpush1.msra.mxu0 0.0
    %475 = vmatprep.subr.mxu0 0.0
    %476 = vmatpush1.msra.mxu0 0.0
    %477 = vmatprep.subr.mxu0 0.0
    %478 = vmatpush1.msra.mxu0 0.0
    %479 = vmatprep.subr.mxu0 0.0
    %480 = vmatpush1.msra.mxu0 0.0
    %481 = vmatprep.subr.mxu0 0.0
    %482 = vmatpush1.msra.mxu0 0.0
    %483 = vmatprep.subr.mxu0 0.0
    %484 = vmatpush1.msra.mxu0 0.0
    %485 = vmatprep.subr.mxu0 0.0
    %486 = vmatpush1.msra.mxu0 0.0
    %487 = vmatprep.subr.mxu0 0.0
    %488 = vmatpush1.msra.mxu0 0.0
    %489 = vmatprep.subr.mxu0 0.0
    %490 = vmatpush1.msra.mxu0 0.0
    %491 = vmatprep.subr.mxu0 0.0
    %492 = vmatpush1.msra.mxu0 0.0
    %493 = vmatprep.subr.mxu0 0.0
    %494 = vmatpush1.msra.mxu0 0.0
    %495 = vmatprep.subr.mxu0 0.0
    %496 = vmatpush1.msra.mxu0 0.0
    %497 = vmatprep.subr.mxu0 0.0
    %498 = vmatpush1.msra.mxu0 0.0
    %499 = vmatprep.subr.mxu0 0.0
    %500 = vmatpush1.msra.mxu0 0.0
    %501 = vmatprep.subr.mxu0 0.0
    %502 = vmatpush1.msra.mxu0 0.0
    %503 = vmatprep.subr.mxu0 0.0
    %504 = vmatpush1.msra.mxu0 0.0
    %505 = vmatprep.subr.mxu0 0.0
    %506 = vmatpush1.msra.mxu0 0.0
    %507 = vmatprep.mubr.f32.mxu0 0.0
    %508 = vmatmul.mubr.f32.gmra.mrb[0].mxu0 %v438
    %v509 = vpop.f32.mrb[0].mxu0
    %v510 = vadd.f32 0.0, %v509
    %v511 = vpop.f32.mrb[0].mxu0
    %512 = vmatprep.mubr.f32.mxu0 0.0
    %513 = vmatmul.mubr.f32.gmra.mrb[0].mxu0 %v441
    %v514 = vpop.f32.mrb[0].mxu0
    %v515 = vadd.f32 0.0, %v514
    %v516 = vpop.f32.mrb[0].mxu0
    %517 = vdwg.mxu0
    %v518 = vsel %vm351, %v328, 0.0
    %v519 = vsel %vm351, %v329, 0.0
    %v520 = vadd.f32 %v518, %v519
    %v521 = vrot.slane %v520, 4
    %v522 = vadd.f32 %v520, %v521
    %v523 = vrot.slane %v522, 2
    %v524 = vadd.f32 %v522, %v523
    %v525 = vrot.slane %v524, 1
    %v526 = vadd.f32 %v524, %v525
    %v528 = vsel %vm351, %v526, 0
    %530 = vmatprep.subr.mxu0 0.0
    %531 = vmatpush1.msra.mxu0 %v343
    %532 = vmatprep.subr.mxu0 0.0
    %533 = vmatpush1.msra.mxu0 %v344
    %534 = vmatprep.subr.mxu0 0.0
    %535 = vmatpush1.msra.mxu0 %v345
    %536 = vmatprep.subr.mxu0 0.0
    %537 = vmatpush1.msra.mxu0 %v346
    %538 = vmatprep.subr.mxu0 0.0
    %539 = vmatpush1.msra.mxu0 %v347
    %540 = vmatprep.subr.mxu0 0.0
    %541 = vmatpush1.msra.mxu0 %v348
    %542 = vmatprep.subr.mxu0 0.0
    %543 = vmatpush1.msra.mxu0 %v349
    %544 = vmatprep.subr.mxu0 0.0
    %545 = vmatpush1.msra.mxu0 %v350
    %546 = vmatprep.subr.mxu0 0.0
    %547 = vmatpush1.msra.mxu0 0.0
    %548 = vmatprep.subr.mxu0 0.0
    %549 = vmatpush1.msra.mxu0 0.0
    %550 = vmatprep.subr.mxu0 0.0
    %551 = vmatpush1.msra.mxu0 0.0
    %552 = vmatprep.subr.mxu0 0.0
    %553 = vmatpush1.msra.mxu0 0.0
    %554 = vmatprep.subr.mxu0 0.0
    %555 = vmatpush1.msra.mxu0 0.0
    %556 = vmatprep.subr.mxu0 0.0
    %557 = vmatpush1.msra.mxu0 0.0
    %558 = vmatprep.subr.mxu0 0.0
    %559 = vmatpush1.msra.mxu0 0.0
    %560 = vmatprep.subr.mxu0 0.0
    %561 = vmatpush1.msra.mxu0 0.0
    %562 = vmatprep.subr.mxu0 0.0
    %563 = vmatpush1.msra.mxu0 0.0
    %564 = vmatprep.subr.mxu0 0.0
    %565 = vmatpush1.msra.mxu0 0.0
    %566 = vmatprep.subr.mxu0 0.0
    %567 = vmatpush1.msra.mxu0 0.0
    %568 = vmatprep.subr.mxu0 0.0
    %569 = vmatpush1.msra.mxu0 0.0
    %570 = vmatprep.subr.mxu0 0.0
    %571 = vmatpush1.msra.mxu0 0.0
    %572 = vmatprep.subr.mxu0 0.0
    %573 = vmatpush1.msra.mxu0 0.0
    %574 = vmatprep.subr.mxu0 0.0
    %575 = vmatpush1.msra.mxu0 0.0
    %576 = vmatprep.subr.mxu0 0.0
    %577 = vmatpush1.msra.mxu0 0.0
    %578 = vmatprep.subr.mxu0 0.0
    %579 = vmatpush1.msra.mxu0 0.0
    %580 = vmatprep.subr.mxu0 0.0
    %581 = vmatpush1.msra.mxu0 0.0
    %582 = vmatprep.subr.mxu0 0.0
    %583 = vmatpush1.msra.mxu0 0.0
    %584 = vmatprep.subr.mxu0 0.0
    %585 = vmatpush1.msra.mxu0 0.0
    %586 = vmatprep.subr.mxu0 0.0
    %587 = vmatpush1.msra.mxu0 0.0
    %588 = vmatprep.subr.mxu0 0.0
    %589 = vmatpush1.msra.mxu0 0.0
    %590 = vmatprep.subr.mxu0 0.0
    %591 = vmatpush1.msra.mxu0 0.0
    %592 = vmatprep.subr.mxu0 0.0
    %593 = vmatpush1.msra.mxu0 0.0
    %594 = vmatprep.mubr.f32.mxu0 0.0
    %595 = vmatmul.mubr.f32.gmra.mrb[0].mxu0 %v528
    %v596 = vpop.f32.mrb[0].mxu0
    %v597 = vadd.f32 0.0, %v596
    %v598 = vpop.f32.mrb[0].mxu0
    %599 = vdwg.mxu0
    %v600 = vlaneseq
    %v601 = vshrl.u32 %v600, 7
    %v602 = vsub.s32 0, %v601
    %v603 = vrot.slane %v597, %v602
    %v604 = vsub.f32 %v328, %v603
    %v605 = vsub.f32 %v329, %v603
    %v606 = vmul.f32 %v604, %v604
    %v607 = vmul.f32 %v605, %v605
    %v608 = vsel %vm351, %v606, 0.0
    %v609 = vsel %vm351, %v607, 0.0
    %v610 = vadd.f32 %v608, %v609
    %v611 = vrot.slane %v610, 4
    %v612 = vadd.f32 %v610, %v611
    %v613 = vrot.slane %v612, 2
    %v614 = vadd.f32 %v612, %v613
    %v615 = vrot.slane %v614, 1
    %v616 = vadd.f32 %v614, %v615
    %v618 = vsel %vm351, %v616, 0
    %620 = vmatprep.subr.mxu0 0.0
    %621 = vmatpush1.msra.mxu0 %v343
    %622 = vmatprep.subr.mxu0 0.0
    %623 = vmatpush1.msra.mxu0 %v344
    %624 = vmatprep.subr.mxu0 0.0
    %625 = vmatpush1.msra.mxu0 %v345
    %626 = vmatprep.subr.mxu0 0.0
    %627 = vmatpush1.msra.mxu0 %v346
    %628 = vmatprep.subr.mxu0 0.0
    %629 = vmatpush1.msra.mxu0 %v347
    %630 = vmatprep.subr.mxu0 0.0
    %631 = vmatpush1.msra.mxu0 %v348
    %632 = vmatprep.subr.mxu0 0.0
    %633 = vmatpush1.msra.mxu0 %v349
    %634 = vmatprep.subr.mxu0 0.0
    %635 = vmatpush1.msra.mxu0 %v350
    %636 = vmatprep.subr.mxu0 0.0
    %637 = vmatpush1.msra.mxu0 0.0
    %638 = vmatprep.subr.mxu0 0.0
    %639 = vmatpush1.msra.mxu0 0.0
    %640 = vmatprep.subr.mxu0 0.0
    %641 = vmatpush1.msra.mxu0 0.0
    %642 = vmatprep.subr.mxu0 0.0
    %643 = vmatpush1.msra.mxu0 0.0
    %644 = vmatprep.subr.mxu0 0.0
    %645 = vmatpush1.msra.mxu0 0.0
    %646 = vmatprep.subr.mxu0 0.0
    %647 = vmatpush1.msra.mxu0 0.0
    %648 = vmatprep.subr.mxu0 0.0
    %649 = vmatpush1.msra.mxu0 0.0
    %650 = vmatprep.subr.mxu0 0.0
    %651 = vmatpush1.msra.mxu0 0.0
    %652 = vmatprep.subr.mxu0 0.0
    %653 = vmatpush1.msra.mxu0 0.0
    %654 = vmatprep.subr.mxu0 0.0
    %655 = vmatpush1.msra.mxu0 0.0
    %656 = vmatprep.subr.mxu0 0.0
    %657 = vmatpush1.msra.mxu0 0.0
    %658 = vmatprep.subr.mxu0 0.0
    %659 = vmatpush1.msra.mxu0 0.0
    %660 = vmatprep.subr.mxu0 0.0
    %661 = vmatpush1.msra.mxu0 0.0
    %662 = vmatprep.subr.mxu0 0.0
    %663 = vmatpush1.msra.mxu0 0.0
    %664 = vmatprep.subr.mxu0 0.0
    %665 = vmatpush1.msra.mxu0 0.0
    %666 = vmatprep.subr.mxu0 0.0
    %667 = vmatpush1.msra.mxu0 0.0
    %668 = vmatprep.subr.mxu0 0.0
    %669 = vmatpush1.msra.mxu0 0.0
    %670 = vmatprep.subr.mxu0 0.0
    %671 = vmatpush1.msra.mxu0 0.0
    %672 = vmatprep.subr.mxu0 0.0
    %673 = vmatpush1.msra.mxu0 0.0
    %674 = vmatprep.subr.mxu0 0.0
    %675 = vmatpush1.msra.mxu0 0.0
    %676 = vmatprep.subr.mxu0 0.0
    %677 = vmatpush1.msra.mxu0 0.0
    %678 = vmatprep.subr.mxu0 0.0
    %679 = vmatpush1.msra.mxu0 0.0
    %680 = vmatprep.subr.mxu0 0.0
    %681 = vmatpush1.msra.mxu0 0.0
    %682 = vmatprep.subr.mxu0 0.0
    %683 = vmatpush1.msra.mxu0 0.0
    %684 = vmatprep.mubr.f32.mxu0 0.0
    %685 = vmatmul.mubr.f32.gmra.mrb[0].mxu0 %v618
    %v686 = vpop.f32.mrb[0].mxu0
    %v687 = vadd.f32 0.0, %v686
    %v688 = vpop.f32.mrb[0].mxu0
    %689 = vdwg.mxu0
    %v690 = vstv %s330
    %v691 = vmul.f32 %v690, %v425
    %v692 = vmul.f32 %v690, %v430
    %v693 = vstv %s331
    %v694 = vmul.f32 %v693, %v597
    %v695 = vlaneseq
    %v696 = vshrl.u32 %v695, 7
    %v697 = vsub.s32 0, %v696
    %v698 = vrot.slane %v694, %v697
    %v699 = vadd.f32 %v691, %v698
    %v700 = vadd.f32 %v692, %v698
    %v701 = vstv %s332
    %v702 = vmul.f32 %v701, %v510
    %v703 = vmul.f32 %v701, %v515
    %v704 = vstv %s333
    %v705 = vmul.f32 %v704, %v687
    %v706 = vlaneseq
    %v707 = vshrl.u32 %v706, 7
    %v708 = vsub.s32 0, %v707
    %v709 = vrot.slane %v705, %v708
    %v710 = vadd.f32 %v702, %v709
    %v711 = vadd.f32 %v703, %v709
    %v712 = vsub.f32 %v328, %v699
    %v713 = vsub.f32 %v329, %v700
    %v714 = vadd.f32 %v710, 1e-05
    %v715 = vadd.f32 %v711, 1e-05
    %v716 = vrsqrt.pop %v714
    %v717 = vrsqrt.pop %v715
    %v718 = vmul.f32 %v712, %v716
    %v719 = vmul.f32 %v713, %v717
    %v720 = vlaneseq
    %v721 = vshrl.u32 %v720, 7
    %v722 = vsub.s32 0, %v721
    %v723 = vrot.slane %v72, %v722
    %v724 = vmul.f32 %v718, %v723
    %v725 = vmul.f32 %v719, %v723
    %v726 = vlaneseq
    %v727 = vshrl.u32 %v726, 7
    %v728 = vsub.s32 0, %v727
    %v729 = vrot.slane %v73, %v728
    %v730 = vadd.f32 %v724, %v729
    %v731 = vadd.f32 %v725, %v729
    %vm732 = vcmp.ge.f32.partialorder %v730, 0.0
    %vm733 = vcmp.ge.f32.partialorder %v731, 0.0
    %v734 = vmul.f32 %v730, 0.01
    %v735 = vmul.f32 %v731, 0.01
    %v736 = vsel %vm732, %v730, %v734
    %v737 = vsel %vm733, %v731, %v735
    %v738 = vpack.c.bf16 %v737, %v736
    %v739 = vld [vmem:[#allocation2] sm:$0xf]
    %v740 = vld [vmem:[#allocation2 + $0x4] sm:$0xf]
    %v741 = vld [vmem:[#allocation2 + $0x8] sm:$0xf]
    %v742 = vld [vmem:[#allocation2 + $0xc] sm:$0xf]
    %v743 = vld [vmem:[#allocation2 + $0x10] sm:$0xf]
    %v744 = vld [vmem:[#allocation2 + $0x14] sm:$0xf]
    %v745 = vld [vmem:[#allocation2 + $0x18] sm:$0xf]
    %v746 = vld [vmem:[#allocation2 + $0x1c] sm:$0xf]
    %747 = vmatprep.subr.bf16.mxu0 0
    %748 = vmatpush1.bf16.msra.mxu0 %v738
    %749 = vmatprep.subr.bf16.mxu0 0
    %750 = vmatpush1.bf16.msra.mxu0 0
    %751 = vmatprep.subr.bf16.mxu0 0
    %752 = vmatpush1.bf16.msra.mxu0 0
    %753 = vmatprep.subr.bf16.mxu0 0
    %754 = vmatpush1.bf16.msra.mxu0 0
    %755 = vmatprep.subr.bf16.mxu0 0
    %756 = vmatpush1.bf16.msra.mxu0 0
    %757 = vmatprep.subr.bf16.mxu0 0
    %758 = vmatpush1.bf16.msra.mxu0 0
    %759 = vmatprep.subr.bf16.mxu0 0
    %760 = vmatpush1.bf16.msra.mxu0 0
    %761 = vmatprep.subr.bf16.mxu0 0
    %762 = vmatpush1.bf16.msra.mxu0 0
    %763 = vmatprep.subr.bf16.mxu0 0
    %764 = vmatpush1.bf16.msra.mxu0 0
    %765 = vmatprep.subr.bf16.mxu0 0
    %766 = vmatpush1.bf16.msra.mxu0 0
    %767 = vmatprep.subr.bf16.mxu0 0
    %768 = vmatpush1.bf16.msra.mxu0 0
    %769 = vmatprep.subr.bf16.mxu0 0
    %770 = vmatpush1.bf16.msra.mxu0 0
    %771 = vmatprep.subr.bf16.mxu0 0
    %772 = vmatpush1.bf16.msra.mxu0 0
    %773 = vmatprep.subr.bf16.mxu0 0
    %774 = vmatpush1.bf16.msra.mxu0 0
    %775 = vmatprep.subr.bf16.mxu0 0
    %776 = vmatpush1.bf16.msra.mxu0 0
    %777 = vmatprep.subr.bf16.mxu0 0
    %778 = vmatpush1.bf16.msra.mxu0 0
    %779 = vmatprep.mubr.bf16.mxu0 0
    %780 = vmatmul.mubr.bf16.gmra.mrb[0].mxu0 %v85
    %v781 = vpop.f32.mrb[0].mxu0
    %v782 = vadd.f32 0.0, %v781
    %v783 = vpop.f32.mrb[0].mxu0
    %v784 = vpop.f32.mrb[0].mxu0
    %v785 = vadd.f32 0.0, %v784
    %v786 = vpop.f32.mrb[0].mxu0
    %787 = vdwg.mxu0
    %v788 = vpack.c.bf16 %v785, %v782
    %s789 = scalar_lea.vmem [#allocation2], 32
    %v790 = vld [vmem:[%s789] sm:$0xf]
    %v791 = vld [vmem:[%s789 + $0x4] sm:$0xf]
    %v792 = vld [vmem:[%s789 + $0x8] sm:$0xf]
    %v793 = vld [vmem:[%s789 + $0xc] sm:$0xf]
    %v794 = vld [vmem:[%s789 + $0x10] sm:$0xf]
    %v795 = vld [vmem:[%s789 + $0x14] sm:$0xf]
    %v796 = vld [vmem:[%s789 + $0x18] sm:$0xf]
    %v797 = vld [vmem:[%s789 + $0x1c] sm:$0xf]
    %v806 = vunpack.c.l.b16 %v790
    %v807 = vunpack.c.l.b16 %v791
    %v808 = vunpack.c.l.b16 %v792
    %v809 = vunpack.c.l.b16 %v793
    %v810 = vunpack.c.l.b16 %v794
    %v811 = vunpack.c.l.b16 %v795
    %v812 = vunpack.c.l.b16 %v796
    %v813 = vunpack.c.l.b16 %v797
    %v814 = vpack.c.b16 %v807, %v806
    %v815 = vpack.c.b16 %v809, %v808
    %v816 = vpack.c.b16 %v811, %v810
    %v817 = vpack.c.b16 %v813, %v812
    %v823 = vsel %vm351, %v788, 0
    %825 = vmatprep.subr.bf16.mxu0 0
    %826 = vmatpush1.bf16.msra.mxu0 %v814
    %827 = vmatprep.subr.bf16.mxu0 0
    %828 = vmatpush1.bf16.msra.mxu0 %v815
    %829 = vmatprep.subr.bf16.mxu0 0
    %830 = vmatpush1.bf16.msra.mxu0 %v816
    %831 = vmatprep.subr.bf16.mxu0 0
    %832 = vmatpush1.bf16.msra.mxu0 %v817
    %833 = vmatprep.subr.bf16.mxu0 0
    %834 = vmatpush1.bf16.msra.mxu0 0
    %835 = vmatprep.subr.bf16.mxu0 0
    %836 = vmatpush1.bf16.msra.mxu0 0
    %837 = vmatprep.subr.bf16.mxu0 0
    %838 = vmatpush1.bf16.msra.mxu0 0
    %839 = vmatprep.subr.bf16.mxu0 0
    %840 = vmatpush1.bf16.msra.mxu0 0
    %841 = vmatprep.subr.bf16.mxu0 0
    %842 = vmatpush1.bf16.msra.mxu0 0
    %843 = vmatprep.subr.bf16.mxu0 0
    %844 = vmatpush1.bf16.msra.mxu0 0
    %845 = vmatprep.subr.bf16.mxu0 0
    %846 = vmatpush1.bf16.msra.mxu0 0
    %847 = vmatprep.subr.bf16.mxu0 0
    %848 = vmatpush1.bf16.msra.mxu0 0
    %849 = vmatprep.subr.bf16.mxu0 0
    %850 = vmatpush1.bf16.msra.mxu0 0
    %851 = vmatprep.subr.bf16.mxu0 0
    %852 = vmatpush1.bf16.msra.mxu0 0
    %853 = vmatprep.subr.bf16.mxu0 0
    %854 = vmatpush1.bf16.msra.mxu0 0
    %855 = vmatprep.subr.bf16.mxu0 0
    %856 = vmatpush1.bf16.msra.mxu0 0
    %857 = vmatprep.mubr.bf16.mxu0 0
    %858 = vmatmul.mubr.bf16.gmra.mrb[0].mxu0 %v823
    %v859 = vpop.f32.mrb[0].mxu0
    %v860 = vadd.f32 0.0, %v859
    %v861 = vpop.f32.mrb[0].mxu0
    %v862 = vpop.f32.mrb[0].mxu0
    %v863 = vadd.f32 0.0, %v862
    %v864 = vpop.f32.mrb[0].mxu0
    %865 = vdwg.mxu0
    %v874 = vunpack.c.l.b16 %v739
    %v875 = vunpack.c.l.b16 %v740
    %v876 = vunpack.c.l.b16 %v741
    %v877 = vunpack.c.l.b16 %v742
    %v878 = vunpack.c.l.b16 %v743
    %v879 = vunpack.c.l.b16 %v744
    %v880 = vunpack.c.l.b16 %v745
    %v881 = vunpack.c.l.b16 %v746
    %v882 = vpack.c.b16 %v875, %v874
    %v883 = vpack.c.b16 %v877, %v876
    %v884 = vpack.c.b16 %v879, %v878
    %v885 = vpack.c.b16 %v881, %v880
    %v891 = vsel %vm351, %v738, 0
    %893 = vmatprep.subr.bf16.mxu0 0
    %894 = vmatpush1.bf16.msra.mxu0 %v882
    %895 = vmatprep.subr.bf16.mxu0 0
    %896 = vmatpush1.bf16.msra.mxu0 %v883
    %897 = vmatprep.subr.bf16.mxu0 0
    %898 = vmatpush1.bf16.msra.mxu0 %v884
    %899 = vmatprep.subr.bf16.mxu0 0
    %900 = vmatpush1.bf16.msra.mxu0 %v885
    %901 = vmatprep.subr.bf16.mxu0 0
    %902 = vmatpush1.bf16.msra.mxu0 0
    %903 = vmatprep.subr.bf16.mxu0 0
    %904 = vmatpush1.bf16.msra.mxu0 0
    %905 = vmatprep.subr.bf16.mxu0 0
    %906 = vmatpush1.bf16.msra.mxu0 0
    %907 = vmatprep.subr.bf16.mxu0 0
    %908 = vmatpush1.bf16.msra.mxu0 0
    %909 = vmatprep.subr.bf16.mxu0 0
    %910 = vmatpush1.bf16.msra.mxu0 0
    %911 = vmatprep.subr.bf16.mxu0 0
    %912 = vmatpush1.bf16.msra.mxu0 0
    %913 = vmatprep.subr.bf16.mxu0 0
    %914 = vmatpush1.bf16.msra.mxu0 0
    %915 = vmatprep.subr.bf16.mxu0 0
    %916 = vmatpush1.bf16.msra.mxu0 0
    %917 = vmatprep.subr.bf16.mxu0 0
    %918 = vmatpush1.bf16.msra.mxu0 0
    %919 = vmatprep.subr.bf16.mxu0 0
    %920 = vmatpush1.bf16.msra.mxu0 0
    %921 = vmatprep.subr.bf16.mxu0 0
    %922 = vmatpush1.bf16.msra.mxu0 0
    %923 = vmatprep.subr.bf16.mxu0 0
    %924 = vmatpush1.bf16.msra.mxu0 0
    %925 = vmatprep.mubr.bf16.mxu0 0
    %926 = vmatmul.mubr.bf16.gmra.mrb[0].mxu0 %v891
    %v927 = vpop.f32.mrb[0].mxu0
    %v928 = vadd.f32 %v860, %v927
    %v929 = vpop.f32.mrb[0].mxu0
    %v930 = vpop.f32.mrb[0].mxu0
    %v931 = vadd.f32 %v863, %v930
    %v932 = vpop.f32.mrb[0].mxu0
    %933 = vdwg.mxu0
    %934 = vmatprep.subr.bf16.mxu0 0
    %935 = vmatpush1.bf16.msra.mxu0 %v788
    %936 = vmatprep.subr.bf16.mxu0 0
    %937 = vmatpush1.bf16.msra.mxu0 0
    %938 = vmatprep.subr.bf16.mxu0 0
    %939 = vmatpush1.bf16.msra.mxu0 0
    %940 = vmatprep.subr.bf16.mxu0 0
    %941 = vmatpush1.bf16.msra.mxu0 0
    %942 = vmatprep.subr.bf16.mxu0 0
    %943 = vmatpush1.bf16.msra.mxu0 0
    %944 = vmatprep.subr.bf16.mxu0 0
    %945 = vmatpush1.bf16.msra.mxu0 0
    %946 = vmatprep.subr.bf16.mxu0 0
    %947 = vmatpush1.bf16.msra.mxu0 0
    %948 = vmatprep.subr.bf16.mxu0 0
    %949 = vmatpush1.bf16.msra.mxu0 0
    %950 = vmatprep.subr.bf16.mxu0 0
    %951 = vmatpush1.bf16.msra.mxu0 0
    %952 = vmatprep.subr.bf16.mxu0 0
    %953 = vmatpush1.bf16.msra.mxu0 0
    %954 = vmatprep.subr.bf16.mxu0 0
    %955 = vmatpush1.bf16.msra.mxu0 0
    %956 = vmatprep.subr.bf16.mxu0 0
    %957 = vmatpush1.bf16.msra.mxu0 0
    %958 = vmatprep.subr.bf16.mxu0 0
    %959 = vmatpush1.bf16.msra.mxu0 0
    %960 = vmatprep.subr.bf16.mxu0 0
    %961 = vmatpush1.bf16.msra.mxu0 0
    %962 = vmatprep.subr.bf16.mxu0 0
    %963 = vmatpush1.bf16.msra.mxu0 0
    %964 = vmatprep.subr.bf16.mxu0 0
    %965 = vmatpush1.bf16.msra.mxu0 0
    %966 = vmatprep.mubr.bf16.mxu0 0
    %967 = vmatmul.mubr.bf16.gmra.mrb[0].mxu0 %v85
    %v968 = vpop.f32.mrb[0].mxu0
    %v969 = vadd.f32 0.0, %v968
    %v970 = vpop.f32.mrb[0].mxu0
    %v971 = vpop.f32.mrb[0].mxu0
    %v972 = vadd.f32 0.0, %v971
    %v973 = vpop.f32.mrb[0].mxu0
    %974 = vdwg.mxu0
    %v975 = vmul.f32 %v969, 2.0
    %v976 = vmul.f32 %v972, 2.0
    %v977 = vsub.f32 %v975, %v736
    %v978 = vsub.f32 %v976, %v737
    %v979 = vpack.c.bf16 %v978, %v977
    %s980 = scalar_lea.vmem [#allocation2], 64
    %v981 = vld [vmem:[%s980] sm:$0xf]
    %v982 = vld [vmem:[%s980 + $0x4] sm:$0xf]
    %v983 = vld [vmem:[%s980 + $0x8] sm:$0xf]
    %v984 = vld [vmem:[%s980 + $0xc] sm:$0xf]
    %v985 = vld [vmem:[%s980 + $0x10] sm:$0xf]
    %v986 = vld [vmem:[%s980 + $0x14] sm:$0xf]
    %v987 = vld [vmem:[%s980 + $0x18] sm:$0xf]
    %v988 = vld [vmem:[%s980 + $0x1c] sm:$0xf]
    %v997 = vunpack.c.l.b16 %v981
    %v998 = vunpack.c.l.b16 %v982
    %v999 = vunpack.c.l.b16 %v983
    %v1000 = vunpack.c.l.b16 %v984
    %v1001 = vunpack.c.l.b16 %v985
    %v1002 = vunpack.c.l.b16 %v986
    %v1003 = vunpack.c.l.b16 %v987
    %v1004 = vunpack.c.l.b16 %v988
    %v1005 = vpack.c.b16 %v998, %v997
    %v1006 = vpack.c.b16 %v1000, %v999
    %v1007 = vpack.c.b16 %v1002, %v1001
    %v1008 = vpack.c.b16 %v1004, %v1003
    %v1014 = vsel %vm351, %v979, 0
    %1016 = vmatprep.subr.bf16.mxu0 0
    %1017 = vmatpush1.bf16.msra.mxu0 %v1005
    %1018 = vmatprep.subr.bf16.mxu0 0
    %1019 = vmatpush1.bf16.msra.mxu0 %v1006
    %1020 = vmatprep.subr.bf16.mxu0 0
    %1021 = vmatpush1.bf16.msra.mxu0 %v1007
    %1022 = vmatprep.subr.bf16.mxu0 0
    %1023 = vmatpush1.bf16.msra.mxu0 %v1008
    %1024 = vmatprep.subr.bf16.mxu0 0
    %1025 = vmatpush1.bf16.msra.mxu0 0
    %1026 = vmatprep.subr.bf16.mxu0 0
    %1027 = vmatpush1.bf16.msra.mxu0 0
    %1028 = vmatprep.subr.bf16.mxu0 0
    %1029 = vmatpush1.bf16.msra.mxu0 0
    %1030 = vmatprep.subr.bf16.mxu0 0
    %1031 = vmatpush1.bf16.msra.mxu0 0
    %1032 = vmatprep.subr.bf16.mxu0 0
    %1033 = vmatpush1.bf16.msra.mxu0 0
    %1034 = vmatprep.subr.bf16.mxu0 0
    %1035 = vmatpush1.bf16.msra.mxu0 0
    %1036 = vmatprep.subr.bf16.mxu0 0
    %1037 = vmatpush1.bf16.msra.mxu0 0
    %1038 = vmatprep.subr.bf16.mxu0 0
    %1039 = vmatpush1.bf16.msra.mxu0 0
    %1040 = vmatprep.subr.bf16.mxu0 0
    %1041 = vmatpush1.bf16.msra.mxu0 0
    %1042 = vmatprep.subr.bf16.mxu0 0
    %1043 = vmatpush1.bf16.msra.mxu0 0
    %1044 = vmatprep.subr.bf16.mxu0 0
    %1045 = vmatpush1.bf16.msra.mxu0 0
    %1046 = vmatprep.subr.bf16.mxu0 0
    %1047 = vmatpush1.bf16.msra.mxu0 0
    %1048 = vmatprep.mubr.bf16.mxu0 0
    %1049 = vmatmul.mubr.bf16.gmra.mrb[0].mxu0 %v1014
    %v1050 = vpop.f32.mrb[0].mxu0
    %v1051 = vadd.f32 0.0, %v1050
    %v1052 = vpop.f32.mrb[0].mxu0
    %v1053 = vpop.f32.mrb[0].mxu0
    %v1054 = vadd.f32 0.0, %v1053
    %v1055 = vpop.f32.mrb[0].mxu0
    %1056 = vdwg.mxu0
    %v1057 = vadd.f32 %v928, %v1051
    %v1058 = vadd.f32 %v931, %v1054
    %v1059 = vlaneseq
    %v1060 = vshrl.u32 %v1059, 7
    %v1061 = vsub.s32 0, %v1060
    %v1062 = vrot.slane %v71, %v1061
    %v1063 = vadd.f32 %v1057, %v1062
    %v1064 = vadd.f32 %v1058, %v1062
    %vm1065 = vcmp.ge.f32.partialorder %v1063, 0.0
    %vm1066 = vcmp.ge.f32.partialorder %v1064, 0.0
    %v1067 = vmul.f32 %v1063, 0.01
    %v1068 = vmul.f32 %v1064, 0.01
    %v1069 = vsel %vm1065, %v1063, %v1067
    %v1070 = vsel %vm1066, %v1064, %v1068
    %1071 = vst.msk [vmem:[%s7] sm:$0xff] %vm351, %v1069
    %1072 = vst.msk [vmem:[%s7 + $0x8] sm:$0xff] %vm351, %v1070
    // Predicated region
    $region42: #{merge_chebnet_forward.1} parent=1 // pred_check
      _
    $region43: #{merge_chebnet_forward.1} parent=1 // pred_check_branch
      %1074 = sbr.rel (0) target = $region45
    $region44: #{merge_chebnet_forward.1} parent=1 // pred_region
      _
    $region45: #{merge_chebnet_forward.1} parent=1 // pred_fallthru
      _
    // Predicated region
    $region46: #{merge_chebnet_forward.1} parent=1 // pred_check
      _
    $region47: #{merge_chebnet_forward.1} parent=1 // pred_check_branch
      %1076 = sbr.rel (0) target = $region49
    $region48: #{merge_chebnet_forward.1} parent=1 // pred_region
      _
    $region49: #{merge_chebnet_forward.1} parent=1 // pred_fallthru
      _
    %1077 = vsyncpa [#allocation3], 1
    %1078 = vsyncpa [#allocation6], 1
    %1079 = vsyncpa [#allocation4], 1

</llo_original>
